<compile_context>
chip_gen: v7x
topology: tpu7x:2x2x1
jax: 0.10.0
libtpu: 0.0.40
codegen_flags: <defaults>
</compile_context>

<pallas_src>
import functools
import math

import jax
import jax.numpy as jnp
from jax import lax
from jax.experimental import pallas as pl
from jax.experimental.pallas import tpu as pltpu

# ----------------- configuration (mirrors DataHandler.__init__) -----------------
BATCH_SIZE = 2
SAMPLING_RATE = 8            # input sampling rate
RESAMPLING_RATE = 8          # == SAMPLING_RATE -> torchaudio Resample is identity
HOP_LENGTH = 4
SEGMENT_LENGTH = 16          # seconds
SEGMENT_CHUNKS = 4
SEGMENT_OVERLAP = 0.5
DROP_PERCENTILE = 0.5
SHORTEST_DURATION = 1        # unused in the Train forward path
LONGEST_DURATION = 100       # unused in the Train forward path
CHUNKS_BELOW_PERCENTILE = 2  # unused in the Train forward path

SEGMENT_SAMPLES = int(SEGMENT_LENGTH * RESAMPLING_RATE)
SEGMENT_SAMPLES = int(SEGMENT_SAMPLES / HOP_LENGTH) * HOP_LENGTH      # 128
CHUNK_SAMPLES = int(SEGMENT_SAMPLES / SEGMENT_CHUNKS)                 # 32
STEP_SAMPLES = int(SEGMENT_SAMPLES * (1 - SEGMENT_OVERLAP))           # 64
CHUNKS_PER_STEP = STEP_SAMPLES // CHUNK_SAMPLES                       # 2
assert STEP_SAMPLES % CHUNK_SAMPLES == 0, "overlap decomposition requires step % chunk == 0"

SUBLANE = 8
# Logical bytes per input block.  The narrow (chunk_samples*channels) lane axis is
# padded to 128 lanes inside VMEM (~2x), so double-buffered this stays well under
# the 16 MiB default scoped VMEM on v5e and the 32 MiB default on v6e/v7x.
BLOCK_BYTES_BUDGET = 3 * 1024 * 1024

# TODO(synk): torchaudio sinc-interpolation resample is not re-implemented; the
# chosen config has sampling_rate == resampling_rate, for which torchaudio's
# Resample.forward returns the waveform unchanged (exact identity).
# TODO(synk): optionally stream the track as bf16 (halves the dominant HBM read,
# biggest win on v5e) if the downstream energy thresholding tolerates it.


def _round_up(n, m):
    return ((n + m - 1) // m) * m


def _choose_chunk_block(n_chunks, per_chunk_bytes):
    """Pick (chunks/block, padded chunk count, grid steps).

    Uniform blocks (chunk axis padded to a multiple of the block), block size near
    the VMEM budget, and >= 2 grid steps whenever the track allows it (v7x
    megacore sharding of the "parallel" grid axis).
    """
    cb_max = max(SUBLANE, (BLOCK_BYTES_BUDGET // per_chunk_bytes) // SUBLANE * SUBLANE)
    c8 = _round_up(n_chunks, SUBLANE)
    cb = min(cb_max, _round_up(pl.cdiv(c8, 2), SUBLANE))
    c_pad = _round_up(c8, cb)
    return cb, c_pad, c_pad // cb


# --------------------------- Pallas kernel: chunk RMS ---------------------------
def _chunk_rms_kernel(x_ref, o_ref, *, inv_count):
    # x_ref: (num_stems, cb, CHUNK_SAMPLES*channels) f32 — a contiguous slab of the
    #        zero-padded track (copy-free reshape in the wrapper, no relayout).
    #        Chunks on the sublane axis, chunk window on the lane axis.
    # o_ref: (cb, 1) f32 — per-chunk RMS.  Output traffic is negligible vs input DMA.
    x = x_ref[...]
    ssq = jnp.sum(x * x, axis=0)                   # VPU: square + stem accumulate -> (cb, lanes)
    ssq = jnp.sum(ssq, axis=1, keepdims=True)      # XLU cross-lane reduce          -> (cb, 1)
    o_ref[...] = jnp.sqrt(ssq * inv_count)         # EUP sqrt (free slot)


def chunk_rms_energies(padded, *, cb, n_chunks):
    """padded: (num_stems, L, channels) f32 with L a multiple of cb*CHUNK_SAMPLES.

    Returns (n_chunks,) per-chunk RMS over (stems, chunk_samples, channels),
    identical to DataHandler.segment_chunk_energies evaluated on every chunk.
    """
    nst, L, ch = padded.shape
    lanes = CHUNK_SAMPLES * ch
    assert L % CHUNK_SAMPLES == 0
    c_pad = L // CHUNK_SAMPLES
    assert c_pad % cb == 0
    grid = c_pad // cb

    # Copy-free view of the contiguous padded track: no transpose, no extra pad.
    x = padded.reshape(nst, c_pad, lanes)

    kernel = functools.partial(
        _chunk_rms_kernel, inv_count=1.0 / float(nst * CHUNK_SAMPLES * ch))
    out = pl.pallas_call(
        kernel,
        out_shape=jax.ShapeDtypeStruct((c_pad, 1), jnp.float32),
        grid=(grid,),
        in_specs=[pl.BlockSpec((nst, cb, lanes), lambda i: (0, i, 0))],
        out_specs=pl.BlockSpec((cb, 1), lambda i: (i, 0)),
        compiler_params=pltpu.CompilerParams(
            dimension_semantics=("parallel",),
            vmem_limit_bytes=32 * 1024 * 1024),
    )(x)
    # Chunks beyond n_chunks are pure zero padding (RMS 0) and are sliced off so
    # they never enter the energy table.
    return out[:n_chunks, 0]


# ------------------------------- JAX glue / plumbing -----------------------------
def trim_segments(stems):
    new_len = (stems.shape[1] // HOP_LENGTH) * HOP_LENGTH
    return stems[:, :new_len, :]


def quantile_midpoint(x, q):
    # matches torch.quantile(..., interpolation='midpoint') for 1-D input
    s = jnp.sort(x)
    n = x.shape[0]
    pos = q * (n - 1)
    lo = int(math.floor(pos))
    hi = int(math.ceil(pos))
    return 0.5 * (s[lo] + s[hi])


def data_handler_forward(stems):
    """Train-mode forward of DataHandler.

    stems: (num_stems, num_samples, channels) float array.
    returns (mix, sources):
      mix:     (BATCH_SIZE, channels, SEGMENT_SAMPLES)
      sources: (BATCH_SIZE, num_stems-1, channels, SEGMENT_SAMPLES)
    """
    x = stems.astype(jnp.float32)
    # permute -> resample -> permute: identity (sampling_rate == resampling_rate)
    x = trim_segments(x)                                  # cut time to hop_length multiple
    nst, Lt, ch = x.shape

    # Reference zero-padding length (add_zero_padding) — defines segment count and
    # the valid chunk count; the extra kernel padding below never enters the table.
    L1 = _round_up(Lt, STEP_SAMPLES)
    ns = L1 // STEP_SAMPLES - 1                           # == len(range(0, L1 - STEP, STEP))
    n_chunks = L1 // CHUNK_SAMPLES

    lanes = CHUNK_SAMPLES * ch
    cb, c_pad, _ = _choose_chunk_block(n_chunks, nst * lanes * 4)
    L_kernel = c_pad * CHUNK_SAMPLES                      # >= L1, multiple of STEP_SAMPLES

    # Single zero-pad pass: serves both the RMS kernel (uniform blocks) and the
    # final segment gather (segments only read [0, L1) <= L_kernel).
    padded = x if L_kernel == Lt else jnp.pad(x, ((0, 0), (0, L_kernel - Lt), (0, 0)))

    # Per-chunk RMS over the whole track (Pallas kernel). Overlapping segments
    # share chunks, so every sample is squared exactly once.
    chunk_rms = chunk_rms_energies(padded, cb=cb, n_chunks=n_chunks)

    # (ns, SEGMENT_CHUNKS) energy table: segment s, chunk c -> global chunk 2*s + c.
    # The table intentionally duplicates shared chunks, matching the PyTorch
    # quantile over the per-segment chunk list.
    seg_idx = (CHUNKS_PER_STEP * jnp.arange(ns)[:, None]
               + jnp.arange(SEGMENT_CHUNKS)[None, :])
    energies = chunk_rms[seg_idx]                         # (ns, SEGMENT_CHUNKS)

    threshold = quantile_midpoint(energies.reshape(-1), DROP_PERCENTILE)
    counts = jnp.sum(energies > threshold, axis=1).astype(jnp.int32)
    # torch.argsort(descending=True) leaves tie order unspecified; we use a
    # deterministic stable descending order (lowest index wins ties).
    order = jnp.argsort(-counts)[:BATCH_SIZE]

    # Gather the selected segments straight from the padded track (no duplicated
    # segment tensor), emitting the (stems, channels, time) layout directly.
    picked = []
    for b in range(BATCH_SIZE):
        start = (order[b] * STEP_SAMPLES).astype(jnp.int32)
        seg = lax.dynamic_slice_in_dim(padded, start, SEGMENT_SAMPLES, axis=1)
        picked.append(jnp.transpose(seg, (0, 2, 1)))      # (nst, ch, T)
    top = jnp.stack(picked, axis=0)                       # (BATCH_SIZE, nst, ch, T)
    return top[:, 0], top[:, 1:]


if __name__ == "__main__":
    key = jax.random.PRNGKey(0)
    num_stems, num_samples, channels = 3, 400, 2
    stems = jax.random.normal(key, (num_stems, num_samples, channels), dtype=jnp.float32)

    mix, sources = jax.jit(data_handler_forward)(stems)
    jax.block_until_ready((mix, sources))

    assert mix.shape == (BATCH_SIZE, channels, SEGMENT_SAMPLES), mix.shape
    assert sources.shape == (BATCH_SIZE, num_stems - 1, channels, SEGMENT_SAMPLES), sources.shape
    print("KERNEL_OK")
</pallas_src>

<mosaic_0001>
module attributes {stable_mosaic.version = 11 : i64} {
  func.func @_chunk_rms_kernel(%arg0: i32, %arg1: memref<3x8x64xf32, #tpu.memory_space<vmem>>, %arg2: memref<8x1xf32, #tpu.memory_space<vmem>>) attributes {dimension_semantics = [#tpu.dimension_semantics<parallel>], iteration_bounds = array<i64: 2>, scalar_prefetch = 0 : i64, scratch_operands = 0 : i64, tpu.core_type = #tpu.core_type<tc>, window_params = [{transform_indices = @transform_0, window_bounds = array<i64: 3, 8, 64>}, {transform_indices = @transform_1, window_bounds = array<i64: 8, 1>}]} {
    %c0 = arith.constant 0 : index
    %c0_0 = arith.constant 0 : index
    %c0_1 = arith.constant 0 : index
    %0 = vector.load %arg1[%c0, %c0_0, %c0_1] : memref<3x8x64xf32, #tpu.memory_space<vmem>>, vector<3x8x64xf32>
    %1 = arith.mulf %0, %0 : vector<3x8x64xf32>
    %cst = arith.constant dense<0.000000e+00> : vector<8x64xf32>
    %2 = vector.multi_reduction <add>, %1, %cst [0] : vector<3x8x64xf32> to vector<8x64xf32>
    %cst_2 = arith.constant dense<0.000000e+00> : vector<8xf32>
    %3 = vector.multi_reduction <add>, %2, %cst_2 [1] : vector<8x64xf32> to vector<8xf32>
    %4 = vector.shape_cast %3 : vector<8xf32> to vector<8x1xf32>
    %cst_3 = arith.constant 0.00520833349 : f32
    %5 = vector.broadcast %cst_3 : f32 to vector<8x1xf32>
    %6 = arith.mulf %4, %5 : vector<8x1xf32>
    %7 = math.sqrt %6 : vector<8x1xf32>
    %c0_4 = arith.constant 0 : index
    %c0_5 = arith.constant 0 : index
    %8 = vector.load %arg2[%c0_4, %c0_5] : memref<8x1xf32, #tpu.memory_space<vmem>>, vector<8x1xf32>
    tpu.vector_store %arg2[%c0_4, %c0_5], %7 {strides = array<i32>} : memref<8x1xf32, #tpu.memory_space<vmem>>, vector<8x1xf32>,
    return
  }
  func.func @transform_0(%arg0: i32) -> (i32, i32, i32) {
    %c0_i32 = arith.constant 0 : i32
    %c0_i32_0 = arith.constant 0 : i32
    %c0_i32_1 = arith.constant 0 : i32
    return %c0_i32, %arg0, %c0_i32_0 : i32, i32, i32
  }
  func.func @transform_1(%arg0: i32) -> (i32, i32) {
    %c0_i32 = arith.constant 0 : i32
    %c0_i32_0 = arith.constant 0 : i32
    return %arg0, %c0_i32 : i32, i32
  }
}

</mosaic_0001>

<llo_original>
// kernel: data_handler_forward.1
$region0: #{data_handler_forward.1}
  #allocation0 [shape = 'u32[]', space=smem, size = 0x4, offset = 0x4, fixed_abs, tag = 'smem constant byte address 0x4 - core index']
  #allocation1 [shape = 'u32[144,128]{1,0:T(1,128)}', space=vmem, size = 0x12000, scoped, tag = 'internal scratch']
  %s0 = inlined_call_operand.vmem [shape: f32[3,16,64], index: 0, kind: input, shape index: {}]
  %s1 = inlined_call_operand.vmem [shape: f32[16,1], index: 1, kind: output, shape index: {}]
  %s2 = sld [smem:[#allocation0]]
  $region75: #{data_handler_forward.1} parent=0
    _
  %s4 = ssub.s32 1, %s2
  %s5 = scalar_select 0, %s4, %s2
  $region1: #{data_handler_forward.1} parent=0
    #allocation2 [shape = 'u8[24576]{0}', space=vmem, size = 0x6000, scoped, tag = 'input window, operand 0']
    loop: start=0, step=1, limit=4
    $region2: #{data_handler_forward.1} parent=1 // loop_pre_header
      _
    $region3: #{data_handler_forward.1} parent=1 // loop_header
      %s7 = sphi 0, %s11
      %p8 = scmp.ge.s32.totalorder %s7, 4
      %s17 = sphi 0, %s19
      %s20 = sphi 0, %s17
      %s21 = sphi 0, %s20
      %s37 = sphi 0, %s21
      %s43 = sphi 0, %s45
      %s46 = sphi 0, %s43
      %s47 = sphi 0, %s46
      %s63 = sphi 0, %s47
    $region4: #{data_handler_forward.1} parent=1 // loop_header_branch
      %10 = sbr.rel (%p8) target = $region8
    $region5: #{data_handler_forward.1} parent=1 // loop_body
      %s12 = ssub.s32 %s7, 1
      %s13 = ssub.s32 %s7, 2
      %s14 = sadd.s32 %s7, 1
      %s15 = ssub.s32 %s7, %s14
      %p16 = scmp.eq.s32.totalorder %s15, 0
      %s18 = sadd.s32 %s17, 1
      %s19 = scalar_select %p16, %s17, %s18
      %p22 = pneg %p16
      %p23 = scmp.eq.s32.totalorder %s7, 1
      %p24 = por %p22, %p23
      %p25 = scmp.ne.s32.totalorder %s17, %s20
      %p26 = scmp.eq.s32.totalorder %s7, 0
      %p27 = por %p25, %p26
      %p28 = scmp.ne.s32.totalorder %s17, %s20
      %p29 = scmp.eq.s32.totalorder %s12, 1
      %p30 = por %p28, %p29
      %p31 = scmp.ne.s32.totalorder %s20, %s21
      %p32 = scmp.eq.s32.totalorder %s12, 0
      %p33 = por %p31, %p32
      %p34 = scmp.ne.s32.totalorder %s20, %s21
      %p35 = scmp.eq.s32.totalorder %s13, 1
      %p36 = por %p34, %p35
      %p38 = scmp.ne.s32.totalorder %s21, %s37
      %p39 = scmp.eq.s32.totalorder %s13, 0
      %p40 = por %p38, %p39
      %s41 = ssub.s32 %s7, %s14
      %p42 = scmp.eq.s32.totalorder %s41, 0
      %s44 = sadd.s32 %s43, 1
      %s45 = scalar_select %p42, %s43, %s44
      %p48 = pneg %p42
      %p49 = scmp.eq.s32.totalorder %s7, 1
      %p50 = por %p48, %p49
      %p51 = scmp.ne.s32.totalorder %s43, %s46
      %p52 = scmp.eq.s32.totalorder %s7, 0
      %p53 = por %p51, %p52
      %p54 = scmp.ne.s32.totalorder %s43, %s46
      %p55 = scmp.eq.s32.totalorder %s12, 1
      %p56 = por %p54, %p55
      %p57 = scmp.ne.s32.totalorder %s46, %s47
      %p58 = scmp.eq.s32.totalorder %s12, 0
      %p59 = por %p57, %p58
      %p60 = scmp.ne.s32.totalorder %s46, %s47
      %p61 = scmp.eq.s32.totalorder %s13, 1
      %p62 = por %p60, %p61
      %p64 = scmp.ne.s32.totalorder %s47, %s63
      %p65 = scmp.eq.s32.totalorder %s13, 0
      %p66 = por %p64, %p65
      %p67 = scmp.le.s32.totalorder 1, %s7
      %p68 = scmp.lt.s32.totalorder %s7, 3
      %p69 = pnand %p67, %p68
      %p70 = pneg %p69
      // Predicated region
      $region9: #{data_handler_forward.1} parent=5 // pred_check
        _
      $region10: #{data_handler_forward.1} parent=5 // pred_check_branch
        %72 = sbr.rel (%p69) target = $region12
      $region11: #{data_handler_forward.1} parent=5 // pred_region
        %s73 = ssub.s32 %s7, 1
      $region12: #{data_handler_forward.1} parent=5 // pred_fallthru
        _
      %p74 = scmp.lt.s32.totalorder %s7, 2
      // Predicated region
      $region13: #{data_handler_forward.1} parent=5 // pred_check
        %p75 = pneg %p74
      $region14: #{data_handler_forward.1} parent=5 // pred_check_branch
        %77 = sbr.rel (%p75) target = $region16
      $region15: #{data_handler_forward.1} parent=5 // pred_region
        // Predicated region
        $region17: #{data_handler_forward.1} parent=15 // pred_check
          %p78 = pneg %p27
        $region18: #{data_handler_forward.1} parent=15 // pred_check_branch
          %80 = sbr.rel (%p78) target = $region20
        $region19: #{data_handler_forward.1} parent=15 // pred_region
          %s81 = sand.u32 %s17, 1
          %s82 = sand.u32 %s17, 1
          %s83 = smul.addr %s82, 24
          %s84 = scalar_lea.vmem [#allocation2], %s83
          %s85 = smul.addr %s7, 8
          %s86 = scalar_lea.vmem %s0, %s85
          // Predicated region
          $region21: #{data_handler_forward.1} parent=19 // pred_check
            _
          $region22: #{data_handler_forward.1} parent=19 // pred_check_branch
            %88 = sbr.rel (0) target = $region24
          $region23: #{data_handler_forward.1} parent=19 // pred_region
            // Predicated region
            $region25: #{data_handler_forward.1} parent=23 // pred_check
              _
            $region26: #{data_handler_forward.1} parent=23 // pred_check_branch
              %90 = sbr.rel (0) target = $region28
            $region27: #{data_handler_forward.1} parent=23 // pred_region
              // Predicated region
              $region40: #{data_handler_forward.1} parent=27 // pred_check
                _
              $region41: #{data_handler_forward.1} parent=27 // pred_check_branch
                %109 = sbr.rel (0) target = $region43
              $region42: #{data_handler_forward.1} parent=27 // pred_region
                loop: start=0, step=1, limit=1
                $region44: #{data_handler_forward.1} parent=42 // loop_pre_header
                  _
                $region45: #{data_handler_forward.1} parent=42 // loop_header
                  %s111 = sphi 0, %s115
                  %p112 = scmp.ge.s32.totalorder %s111, 1
                  %s116 = sphi %s86, %s86
                  %s117 = sphi %s84, %s84
                $region46: #{data_handler_forward.1} parent=42 // loop_header_branch
                  %114 = sbr.rel (%p112) target = $region50
                $region47: #{data_handler_forward.1} parent=42 // loop_body
                  %v118 = vld [vmem:[%s116] sm:$0xff]
                  %119 = vst [vmem:[%s117] sm:$0xff] %v118
                  %v120 = vld [vmem:[%s116 + $0x10] sm:$0xff]
                  %121 = vst [vmem:[%s117 + $0x8] sm:$0xff] %v120
                  %v122 = vld [vmem:[%s116 + $0x20] sm:$0xff]
                  %123 = vst [vmem:[%s117 + $0x10] sm:$0xff] %v122
                $region48: #{data_handler_forward.1} parent=42 // loop_footer
                  %s115 = sadd.s32 1, %s111
                $region49: #{data_handler_forward.1} parent=42 // loop_footer_branch
                  %110 = sbr.rel target = $region45
                $region50: #{data_handler_forward.1} parent=42 // loop_exit
                  _
              $region43: #{data_handler_forward.1} parent=27 // pred_fallthru
                _
              // Predicated region
              $region51: #{data_handler_forward.1} parent=27 // pred_check
                _
              $region52: #{data_handler_forward.1} parent=27 // pred_check_branch
                %125 = sbr.rel target = $region54
              $region53: #{data_handler_forward.1} parent=27 // pred_region
                _
              $region54: #{data_handler_forward.1} parent=27 // pred_fallthru
                _
            $region28: #{data_handler_forward.1} parent=23 // pred_fallthru
              _
            // Predicated region
            $region29: #{data_handler_forward.1} parent=23 // pred_check
              _
            $region30: #{data_handler_forward.1} parent=23 // pred_check_branch
              %92 = sbr.rel target = $region32
            $region31: #{data_handler_forward.1} parent=23 // pred_region
              loop: start=0, step=1, limit=1
              $region33: #{data_handler_forward.1} parent=31 // loop_pre_header
                _
              $region34: #{data_handler_forward.1} parent=31 // loop_header
                %s95 = sphi 0, %s99
                %p96 = scmp.ge.s32.totalorder %s95, 1
                %s100 = sphi %s86, %s86
                %s101 = sphi %s84, %s84
              $region35: #{data_handler_forward.1} parent=31 // loop_header_branch
                %98 = sbr.rel (%p96) target = $region39
              $region36: #{data_handler_forward.1} parent=31 // loop_body
                %v102 = vld [vmem:[%s100] sm:$0xff]
                %103 = vst [vmem:[%s101] sm:$0xff] %v102
                %v104 = vld [vmem:[%s100 + $0x10] sm:$0xff]
                %105 = vst [vmem:[%s101 + $0x8] sm:$0xff] %v104
                %v106 = vld [vmem:[%s100 + $0x20] sm:$0xff]
                %107 = vst [vmem:[%s101 + $0x10] sm:$0xff] %v106
              $region37: #{data_handler_forward.1} parent=31 // loop_footer
                %s99 = sadd.s32 1, %s95
              $region38: #{data_handler_forward.1} parent=31 // loop_footer_branch
                %94 = sbr.rel target = $region34
              $region39: #{data_handler_forward.1} parent=31 // loop_exit
                _
            $region32: #{data_handler_forward.1} parent=23 // pred_fallthru
              _
          $region24: #{data_handler_forward.1} parent=19 // pred_fallthru
            _
          %126 = vnop
        $region20: #{data_handler_forward.1} parent=15 // pred_fallthru
          _
      $region16: #{data_handler_forward.1} parent=5 // pred_fallthru
        _
      %p127 = scmp.le.s32.totalorder 1, %s7
      %p128 = scmp.lt.s32.totalorder %s7, 3
      %p129 = pnand %p127, %p128
      %p130 = pneg %p129
      // Predicated region
      $region55: #{data_handler_forward.1} parent=5 // pred_check
        _
      $region56: #{data_handler_forward.1} parent=5 // pred_check_branch
        %132 = sbr.rel (%p129) target = $region58
      $region57: #{data_handler_forward.1} parent=5 // pred_region
        %s133 = ssub.s32 %s7, 1
        %s134 = sand.u32 %s20, 1
        %s135 = sand.u32 %s20, 1
        %s136 = smul.addr %s135, 24
        %s137 = scalar_lea.vmem [#allocation2], %s136
        // Predicated region
        $region59: #{data_handler_forward.1} parent=57 // pred_check
          %p138 = pneg %p33
        $region60: #{data_handler_forward.1} parent=57 // pred_check_branch
          %140 = sbr.rel (%p138) target = $region62
        $region61: #{data_handler_forward.1} parent=57 // pred_region
          _
        $region62: #{data_handler_forward.1} parent=57 // pred_fallthru
          _
        %s141 = sand.u32 %s20, 1
        %s142 = sand.u32 %s20, 1
        %s143 = smul.addr %s142, 24
        %s144 = scalar_lea.vmem [#allocation2], %s143
        %p145 = pneg %p33
        %p146 = pneg %p30
        %p147 = pneg %p59
        %p148 = pneg %p56
        %p149 = scmp.lt.s32.totalorder %s12, 1
        %s150 = scalar_select %p149, %s12, 1
        %s151 = smul.addr %s150, 8
        %s152 = scalar_lea.vmem %s1, %s151
        %p153 = scmp.lt.s32.totalorder %s12, 1
        %s154 = scalar_select %p153, %s12, 1
        %s155 = smul.addr %s154, 8
        %s156 = scalar_lea.vmem %s1, %s155
        %v157 = vld [vmem:[%s137] sm:$0xff]
        %v158 = vld [vmem:[%s137 + $0x8] sm:$0xff]
        %v159 = vld [vmem:[%s137 + $0x10] sm:$0xff]
        %v160 = vmul.f32 %v157, %v157
        %v161 = vmul.f32 %v158, %v158
        %v162 = vmul.f32 %v159, %v159
        %vm163 = vcmask 523264
        %v164 = vsel %vm163, %v160, 0.0
        %v165 = vsel %vm163, %v161, 0.0
        %v166 = vadd.f32 %v164, %v165
        %v167 = vsel %vm163, %v162, 0.0
        %v168 = vadd.f32 %v166, %v167
        %v169 = vsel %vm163, %v168, 0.0
        %170 = vadd.xlane.f32.xlu0 %v169
        %v171 = vpop.xlane.xlu0 %170
        %v172 = vmul.f32 %v171, 0.0052083335
        %v173 = vrsqrt.pop %v172
        %v174 = vmul.f32 %v172, %v173
        %vm175 = vcmp.eq.f32.partialorder %v172, inf
        %v176 = vsel %vm175, %v172, %v174
        %vm177 = vcmp.eq.f32.partialorder %v172, 0.0
        %v178 = vand.u32 %v172, 2147483648
        %v179 = vsel %vm177, %v178, %v176
        %vm180 = vcmask 7168
        %181 = vst.msk [vmem:[%s156] sm:$0xff] %vm180, %v179
        %p182 = scmp.lt.s32.totalorder %s12, 1
        %s183 = scalar_select %p182, %s12, 1
        %s184 = smul.addr %s183, 8
        %s185 = scalar_lea.vmem %s1, %s184
        // Predicated region
        $region63: #{data_handler_forward.1} parent=57 // pred_check
          %p186 = pneg %p56
        $region64: #{data_handler_forward.1} parent=57 // pred_check_branch
          %188 = sbr.rel (%p186) target = $region66
        $region65: #{data_handler_forward.1} parent=57 // pred_region
          _
        $region66: #{data_handler_forward.1} parent=57 // pred_fallthru
          _
      $region58: #{data_handler_forward.1} parent=5 // pred_fallthru
        _
      %p189 = scmp.le.s32.totalorder 2, %s7
      // Predicated region
      $region67: #{data_handler_forward.1} parent=5 // pred_check
        %p190 = pneg %p189
      $region68: #{data_handler_forward.1} parent=5 // pred_check_branch
        %192 = sbr.rel (%p190) target = $region70
      $region69: #{data_handler_forward.1} parent=5 // pred_region
        %s193 = ssub.s32 %s7, 2
        // Predicated region
        $region71: #{data_handler_forward.1} parent=69 // pred_check
          %p194 = pneg %p62
        $region72: #{data_handler_forward.1} parent=69 // pred_check_branch
          %196 = sbr.rel (%p194) target = $region74
        $region73: #{data_handler_forward.1} parent=69 // pred_region
          %p197 = scmp.lt.s32.totalorder %s13, 1
          %s198 = scalar_select %p197, %s13, 1
          %s199 = smul.addr %s198, 8
          %s200 = scalar_lea.vmem %s1, %s199
        $region74: #{data_handler_forward.1} parent=69 // pred_fallthru
          _
      $region70: #{data_handler_forward.1} parent=5 // pred_fallthru
        _
    $region6: #{data_handler_forward.1} parent=1 // loop_footer
      %s11 = sadd.s32 1, %s7
    $region7: #{data_handler_forward.1} parent=1 // loop_footer_branch
      %6 = sbr.rel target = $region3
    $region8: #{data_handler_forward.1} parent=1 // loop_exit
      _

// kernel: neg.1
$region0: #{neg.1}
  #allocation0 [shape = 's32[1]{0}', space=sflag, size = 0x4, scoped, tag = 'scoped memory for neg.1']
  %s0 = inlined_call_operand.vmem [shape: s32[6], index: 0, kind: input, shape index: {}]
  %s1 = inlined_call_operand.vmem [shape: s32[6], index: 1, kind: output, shape index: {}]
  %v2 = vld [vmem:[%s0] sm:$0x1]
  %3 = xla_tuple %v2
  %4 = xla_tuple %3
  %v5 = vsub.s32 0, %v2
  %6 = xla_tuple %v5
  %7 = vst [vmem:[%s1] sm:$0x1] %v5

</llo_original>
